<compile_context>
chip_gen: v6e
topology: v6e:2x2x1
jax: 0.10.0
libtpu: 0.0.40
codegen_flags: <defaults>
</compile_context>

<pallas_src>
import functools

import jax
import jax.numpy as jnp
from jax import lax
from jax.experimental import pallas as pl
from jax.experimental.pallas import tpu as pltpu


def _addnorm_kernel(*refs, p, eps, hw_prng):
    """refs = (seed_ref, x_ref, y_ref, [bits_ref], gamma_ref, beta_ref, o_ref)."""
    use_bits = (0.0 < p < 1.0) and not hw_prng
    if use_bits:
        seed_ref, x_ref, y_ref, bits_ref, gamma_ref, beta_ref, o_ref = refs
    else:
        seed_ref, x_ref, y_ref, gamma_ref, beta_ref, o_ref = refs
        bits_ref = None

    x = x_ref[...].astype(jnp.float32)

    if p >= 1.0:
        # nn.Dropout(p=1) zeroes Y entirely (1/(1-p) undefined), so drop Y.
        # NOTE: dropout mask never bit-matches torch's RNG (expected).
        z = x
    else:
        y = y_ref[...].astype(jnp.float32)
        if p > 0.0:
            scale = jnp.float32(1.0 / (1.0 - p))
            if hw_prng:
                # In-kernel hardware PRNG: no extra HBM stream for dropout bits.
                pltpu.prng_seed(seed_ref[0], pl.program_id(0))
                raw = pltpu.prng_random_bits(y.shape)
                if raw.dtype != jnp.int32:
                    raw = pltpu.bitcast(raw, jnp.int32)
                r31 = raw & jnp.int32(0x7FFFFFFF)           # 31 uniform bits
                thresh = jnp.int32(min(int(p * 2147483648.0), 2147483647))
                keep = r31 >= thresh
            else:
                # Interpret / non-TPU fallback: uint8 bits streamed from host
                # (1 B/elem instead of 4).
                thresh = jnp.uint8(min(int(round(p * 256.0)), 255))
                keep = bits_ref[...] >= thresh
            y = jnp.where(keep, y * scale, jnp.float32(0.0))
        z = x + y

    # LayerNorm over the last (hidden) dim.  Centered two-pass variance
    # (cancellation-safe); the extra cross-lane reduce hides under the DMA.
    h = jnp.float32(z.shape[-1])
    mean = jnp.sum(z, axis=-1, keepdims=True) / h
    d = z - mean
    var = jnp.sum(d * d, axis=-1, keepdims=True) / h
    out = d * lax.rsqrt(var + eps) * gamma_ref[...].astype(jnp.float32) \
        + beta_ref[...].astype(jnp.float32)
    o_ref[...] = out.astype(o_ref.dtype)


def _round_up(n, m):
    return ((n + m - 1) // m) * m


def _vmem_budget():
    """Generation-aware (target bytes per stream buffer, row cap, scoped-VMEM cap)."""
    try:
        cap = getattr(pltpu.get_tpu_info(), "vmem_capacity_bytes", None)
    except Exception:
        cap = None
    if cap is not None and cap >= 100 * 1024 * 1024:
        # v5e / v6e: 128 MiB physical VMEM -> bigger tiles, higher scoped limit.
        return 6 << 20, 8192, 96 << 20
    # v7x (64 MiB physical per TC) or unknown: stay well under the physical cap.
    return 4 << 20, 4096, 40 << 20


def _pick_row_tile(rows, H, itemsize, target_bytes, row_cap):
    rt = target_bytes // max(H * itemsize, 1)
    rt = max(8, min(row_cap, rt))
    rt = (rt // 8) * 8
    rt = min(rt, _round_up(rows, 8))   # never bigger than the problem
    return max(rt, 8)


def add_norm(x, y, gamma, beta, *, dropout_p=0.0, eps=1e-5, seed=0, row_tile=None):
    """dropout(y) + x, then LayerNorm over the last dim.  x, y: (B, S, H)."""
    assert x.shape == y.shape
    B, S, H = x.shape
    rows = B * S
    p = float(dropout_p)
    itemsize = jnp.dtype(x.dtype).itemsize

    target_bytes, row_cap, vmem_cap = _vmem_budget()
    if row_tile is None:
        row_tile = _pick_row_tile(rows, H, itemsize, target_bytes, row_cap)
    row_tile = max(8, (int(row_tile) // 8) * 8)

    # Non-divisible row counts are handled by the partial last grid block (the
    # pipeline only copies the valid sub-rectangle to/from HBM); no jnp.pad /
    # output-slice round trip through HBM.
    grid = (pl.cdiv(rows, row_tile),)

    x2 = x.reshape(rows, H)
    y2 = y.reshape(rows, H)
    g2 = gamma.reshape(1, H)
    b2 = beta.reshape(1, H)
    seed_arr = jnp.asarray([seed], dtype=jnp.int32)

    hw_prng = jax.default_backend() == "tpu"
    use_bits = (0.0 < p < 1.0) and not hw_prng

    tile_spec = pl.BlockSpec((row_tile, H), lambda i, s_ref: (i, 0))
    param_spec = pl.BlockSpec((1, H), lambda i, s_ref: (0, 0))

    inputs = [seed_arr, x2, y2]
    in_specs = [tile_spec, tile_spec]
    if use_bits:
        key = jax.random.PRNGKey(seed)
        bits = jax.random.bits(key, (rows, H), dtype=jnp.uint8)
        inputs.append(bits)
        in_specs.append(tile_spec)
    inputs.extend([g2, b2])
    in_specs.extend([param_spec, param_spec])

    # Scoped-VMEM limit derived from the actual double-buffered streams plus
    # headroom for f32 temporaries, capped per generation (<=40 MiB on v7x).
    n_streams = 3 + (1 if use_bits else 0)
    derived = n_streams * 2 * row_tile * H * itemsize + 6 * row_tile * H * 4 + (4 << 20)
    vmem_limit = int(max(16 << 20, min(derived, vmem_cap)))

    kernel = functools.partial(_addnorm_kernel, p=p, eps=float(eps), hw_prng=hw_prng)

    out = pl.pallas_call(
        kernel,
        out_shape=jax.ShapeDtypeStruct((rows, H), x.dtype),
        grid_spec=pltpu.PrefetchScalarGridSpec(
            num_scalar_prefetch=1,
            grid=grid,
            in_specs=in_specs,
            out_specs=tile_spec,
        ),
        compiler_params=pltpu.CompilerParams(
            dimension_semantics=("parallel",),
            vmem_limit_bytes=vmem_limit,
        ),
    )(*inputs)

    return out.reshape(B, S, H)


def _reference_addnorm_no_dropout(x, y, gamma, beta, eps=1e-5):
    z = (x + y).astype(jnp.float32)
    mean = jnp.mean(z, axis=-1, keepdims=True)
    var = jnp.mean((z - mean) ** 2, axis=-1, keepdims=True)
    return ((z - mean) * lax.rsqrt(var + eps) * gamma + beta).astype(x.dtype)


if __name__ == "__main__":
    key = jax.random.PRNGKey(0)
    kx, ky, kx2, ky2 = jax.random.split(key, 4)

    B, S, H = 2, 8, 32          # normalized_shape = H = 32
    dropout_p = 0.1

    x = jax.random.normal(kx, (B, S, H), dtype=jnp.float32)
    y = jax.random.normal(ky, (B, S, H), dtype=jnp.float32)

    # nn.LayerNorm default init: weight = ones, bias = zeros (deterministic).
    gamma = jnp.ones((H,), dtype=jnp.float32)
    beta = jnp.zeros((H,), dtype=jnp.float32)

    # Eval-mode path (dropout disabled) vs pure-JAX reference.
    out_eval = add_norm(x, y, gamma, beta, dropout_p=0.0)
    ref_eval = _reference_addnorm_no_dropout(x, y, gamma, beta)
    jax.block_until_ready(out_eval)
    assert jnp.allclose(out_eval, ref_eval, atol=1e-5, rtol=1e-5), (
        float(jnp.max(jnp.abs(out_eval - ref_eval))))

    # Non-divisible row count exercises the partial-last-block (no-pad) path.
    x_odd = jax.random.normal(kx2, (3, 5, H), dtype=jnp.float32)
    y_odd = jax.random.normal(ky2, (3, 5, H), dtype=jnp.float32)
    out_odd = add_norm(x_odd, y_odd, gamma, beta, dropout_p=0.0, row_tile=8)
    ref_odd = _reference_addnorm_no_dropout(x_odd, y_odd, gamma, beta)
    jax.block_until_ready(out_odd)
    assert jnp.allclose(out_odd, ref_odd, atol=1e-5, rtol=1e-5)

    # Train-mode path: dropout mask generated by the in-kernel hardware PRNG.
    out_train = add_norm(x, y, gamma, beta, dropout_p=dropout_p, seed=42)
    jax.block_until_ready(out_train)
    assert out_train.shape == (B, S, H)
    assert bool(jnp.all(jnp.isfinite(out_train)))
    # LayerNorm invariant (weight=1, bias=0): per-row mean ~ 0.
    row_means = jnp.mean(out_train.reshape(-1, H).astype(jnp.float32), axis=-1)
    assert bool(jnp.max(jnp.abs(row_means)) < 1e-4)

    print("KERNEL_OK")
</pallas_src>

<mosaic_0001>
module attributes {stable_mosaic.version = 11 : i64} {
  func.func @_addnorm_kernel(%arg0: i32, %arg1: memref<1xi32, #tpu.memory_space<smem>>, %arg2: memref<16x32xf32, #tpu.memory_space<vmem>>, %arg3: memref<16x32xf32, #tpu.memory_space<vmem>>, %arg4: memref<1x32xf32, #tpu.memory_space<vmem>>, %arg5: memref<1x32xf32, #tpu.memory_space<vmem>>, %arg6: memref<16x32xf32, #tpu.memory_space<vmem>>) attributes {dimension_semantics = [#tpu.dimension_semantics<parallel>], iteration_bounds = array<i64: 1>, scalar_prefetch = 1 : i64, scratch_operands = 0 : i64, tpu.core_type = #tpu.core_type<tc>, window_params = [{transform_indices = @transform_0, window_bounds = array<i64: 16, 32>}, {transform_indices = @transform_1, window_bounds = array<i64: 16, 32>}, {pipeline_mode = #tpu.pipeline_mode<synchronous>, transform_indices = @transform_2, window_bounds = array<i64: 1, 32>}, {pipeline_mode = #tpu.pipeline_mode<synchronous>, transform_indices = @transform_3, window_bounds = array<i64: 1, 32>}, {transform_indices = @transform_4, window_bounds = array<i64: 16, 32>}]} {
    %c0 = arith.constant 0 : index
    %c0_0 = arith.constant 0 : index
    %0 = vector.load %arg2[%c0, %c0_0] : memref<16x32xf32, #tpu.memory_space<vmem>>, vector<16x32xf32>
    %c0_1 = arith.constant 0 : index
    %c0_2 = arith.constant 0 : index
    %1 = vector.load %arg3[%c0_1, %c0_2] : memref<16x32xf32, #tpu.memory_space<vmem>>, vector<16x32xf32>
    %2 = arith.addf %0, %1 : vector<16x32xf32>
    %cst = arith.constant dense<0.000000e+00> : vector<16xf32>
    %3 = vector.multi_reduction <add>, %2, %cst [1] : vector<16x32xf32> to vector<16xf32>
    %4 = vector.shape_cast %3 : vector<16xf32> to vector<16x1xf32>
    %cst_3 = arith.constant 3.200000e+01 : f32
    %5 = vector.broadcast %cst_3 : f32 to vector<16x1xf32>
    %6 = arith.divf %4, %5 : vector<16x1xf32>
    %7 = vector.broadcast %6 : vector<16x1xf32> to vector<16x32xf32>
    %8 = arith.subf %2, %7 : vector<16x32xf32>
    %9 = arith.mulf %8, %8 : vector<16x32xf32>
    %cst_4 = arith.constant dense<0.000000e+00> : vector<16xf32>
    %10 = vector.multi_reduction <add>, %9, %cst_4 [1] : vector<16x32xf32> to vector<16xf32>
    %11 = vector.shape_cast %10 : vector<16xf32> to vector<16x1xf32>
    %cst_5 = arith.constant 3.200000e+01 : f32
    %12 = vector.broadcast %cst_5 : f32 to vector<16x1xf32>
    %13 = arith.divf %11, %12 : vector<16x1xf32>
    %cst_6 = arith.constant 9.99999974E-6 : f32
    %14 = vector.broadcast %cst_6 : f32 to vector<16x1xf32>
    %15 = arith.addf %13, %14 : vector<16x1xf32>
    %16 = math.rsqrt %15 : vector<16x1xf32>
    %17 = vector.broadcast %16 : vector<16x1xf32> to vector<16x32xf32>
    %18 = arith.mulf %8, %17 : vector<16x32xf32>
    %c0_7 = arith.constant 0 : index
    %c0_8 = arith.constant 0 : index
    %19 = vector.load %arg4[%c0_7, %c0_8] : memref<1x32xf32, #tpu.memory_space<vmem>>, vector<1x32xf32>
    %20 = vector.broadcast %19 : vector<1x32xf32> to vector<16x32xf32>
    %21 = arith.mulf %18, %20 : vector<16x32xf32>
    %c0_9 = arith.constant 0 : index
    %c0_10 = arith.constant 0 : index
    %22 = vector.load %arg5[%c0_9, %c0_10] : memref<1x32xf32, #tpu.memory_space<vmem>>, vector<1x32xf32>
    %23 = vector.broadcast %22 : vector<1x32xf32> to vector<16x32xf32>
    %24 = arith.addf %21, %23 : vector<16x32xf32>
    %c0_11 = arith.constant 0 : index
    %c0_12 = arith.constant 0 : index
    %25 = vector.load %arg6[%c0_11, %c0_12] : memref<16x32xf32, #tpu.memory_space<vmem>>, vector<16x32xf32>
    tpu.vector_store %arg6[%c0_11, %c0_12], %24 {strides = array<i32>} : memref<16x32xf32, #tpu.memory_space<vmem>>, vector<16x32xf32>,
    return
  }
  func.func @transform_0(%arg0: i32, %arg1: memref<1xi32, #tpu.memory_space<smem>>) -> (i32, i32) {
    %c0_i32 = arith.constant 0 : i32
    %c0_i32_0 = arith.constant 0 : i32
    return %arg0, %c0_i32 : i32, i32
  }
  func.func @transform_1(%arg0: i32, %arg1: memref<1xi32, #tpu.memory_space<smem>>) -> (i32, i32) {
    %c0_i32 = arith.constant 0 : i32
    %c0_i32_0 = arith.constant 0 : i32
    return %arg0, %c0_i32 : i32, i32
  }
  func.func @transform_2(%arg0: i32, %arg1: memref<1xi32, #tpu.memory_space<smem>>) -> (i32, i32) {
    %c0_i32 = arith.constant 0 : i32
    %c0_i32_0 = arith.constant 0 : i32
    %c0_i32_1 = arith.constant 0 : i32
    return %c0_i32, %c0_i32_0 : i32, i32
  }
  func.func @transform_3(%arg0: i32, %arg1: memref<1xi32, #tpu.memory_space<smem>>) -> (i32, i32) {
    %c0_i32 = arith.constant 0 : i32
    %c0_i32_0 = arith.constant 0 : i32
    %c0_i32_1 = arith.constant 0 : i32
    return %c0_i32, %c0_i32_0 : i32, i32
  }
  func.func @transform_4(%arg0: i32, %arg1: memref<1xi32, #tpu.memory_space<smem>>) -> (i32, i32) {
    %c0_i32 = arith.constant 0 : i32
    %c0_i32_0 = arith.constant 0 : i32
    return %arg0, %c0_i32 : i32, i32
  }
}

</mosaic_0001>

<llo_original>
// kernel: tpu_custom_call.1
$region0: #{tpu_custom_call.1}
  #allocation0 [shape = 'u32[]', space=smem, size = 0x4, offset = 0x4, fixed_abs, tag = 'smem constant byte address 0x4 - core index']
  #allocation1 [shape = 'u32[144,128]{1,0:T(1,128)}', space=vmem, size = 0x12000, scoped, tag = 'internal scratch']
  #allocation2 [shape = 's32[1]{0}', space=sflag, size = 0x4, scoped, tag = 'scoped memory for tpu_custom_call.1']
  #allocation3 [shape = 's32[1]{0:T(128)S(6)}', space=smem, size = 0x200, scoped, tag = 'prefetched SMEM operand 0']
  %s0 = inlined_call_operand.<no memory space> [shape: s32[1], index: 0, kind: input, shape index: {}]
  %s1 = inlined_call_operand.hbm [shape: f32[16,32], index: 1, kind: input, shape index: {}]
  %s2 = inlined_call_operand.hbm [shape: f32[16,32], index: 2, kind: input, shape index: {}]
  %s3 = inlined_call_operand.vmem [shape: f32[1,32], index: 3, kind: input, shape index: {}]
  %s4 = inlined_call_operand.vmem [shape: f32[1,32], index: 4, kind: input, shape index: {}]
  %s5 = inlined_call_operand.hbm [shape: f32[16,32], index: 5, kind: output, shape index: {}]
  %s6 = sld [smem:[#allocation0]]
  $region34: #{tpu_custom_call.1} parent=0
    _
  %s8 = ssub.s32 1, %s6
  %s9 = scalar_select 0, %s8, %s6
  %10 = sst [smem:[#allocation3]] %s0
  $region1: #{tpu_custom_call.1} parent=0
    #allocation4 [shape = 'u8[8192]{0}', space=vmem, size = 0x2000, scoped, tag = 'input window, operand 1, single buffered']
    #allocation5 [shape = 's32[1]{0}', space=sflag, size = 0x4, scoped, tag = 'scoped memory for tpu_custom_call.1']
    #allocation6 [shape = 's32[1]{0}', space=sflag, size = 0x4, scoped, tag = 'scoped memory for tpu_custom_call.1']
    #allocation7 [shape = 'u8[8192]{0}', space=vmem, size = 0x2000, scoped, tag = 'input window, operand 2, single buffered']
    #allocation8 [shape = 's32[1]{0}', space=sflag, size = 0x4, scoped, tag = 'scoped memory for tpu_custom_call.1']
    #allocation9 [shape = 'u8[8192]{0}', space=vmem, size = 0x2000, scoped, tag = 'output window, operand 0, single buffered']
    %11 = vsyncpa [#allocation5], 0
    %12 = vsyncpa [#allocation8], 0
    %13 = vsyncpa [#allocation6], 0
    // Predicated region
    $region2: #{tpu_custom_call.1} parent=1 // pred_check
      _
    $region3: #{tpu_custom_call.1} parent=1 // pred_check_branch
      %15 = sbr.rel (0) target = $region5
    $region4: #{tpu_custom_call.1} parent=1 // pred_region
      %s17 = ssub.s32 256, 256
      %18 = vsyncadd [#allocation5], %s17
      %s19 = sshll.u32 [#allocation4], 4
      %s20 = int_to_ptr.vmem [resolvable:$true] %s19
      %25 = dma.hbm_to_vmem [thread:$0]  %s1, 256, %s20, [#allocation5], 128, 128, 8
    $region5: #{tpu_custom_call.1} parent=1 // pred_fallthru
      _
    // Predicated region
    $region6: #{tpu_custom_call.1} parent=1 // pred_check
      _
    $region7: #{tpu_custom_call.1} parent=1 // pred_check_branch
      %27 = sbr.rel (0) target = $region9
    $region8: #{tpu_custom_call.1} parent=1 // pred_region
      %s29 = ssub.s32 256, 256
      %30 = vsyncadd [#allocation8], %s29
      %s31 = sshll.u32 [#allocation7], 4
      %s32 = int_to_ptr.vmem [resolvable:$true] %s31
      %37 = dma.hbm_to_vmem [thread:$0]  %s2, 256, %s32, [#allocation8], 128, 128, 8
    $region9: #{tpu_custom_call.1} parent=1 // pred_fallthru
      _
    // Predicated region
    $region10: #{tpu_custom_call.1} parent=1 // pred_check
      _
    $region11: #{tpu_custom_call.1} parent=1 // pred_check_branch
      %39 = sbr.rel (0) target = $region13
    $region12: #{tpu_custom_call.1} parent=1 // pred_region
      _
    $region13: #{tpu_custom_call.1} parent=1 // pred_fallthru
      _
    // Predicated region
    $region14: #{tpu_custom_call.1} parent=1 // pred_check
      _
    $region15: #{tpu_custom_call.1} parent=1 // pred_check_branch
      %41 = sbr.rel (0) target = $region17
    $region16: #{tpu_custom_call.1} parent=1 // pred_region
      _
    $region17: #{tpu_custom_call.1} parent=1 // pred_fallthru
      _
    // Predicated region
    $region18: #{tpu_custom_call.1} parent=1 // pred_check
      _
    $region19: #{tpu_custom_call.1} parent=1 // pred_check_branch
      %43 = sbr.rel (0) target = $region21
    $region20: #{tpu_custom_call.1} parent=1 // pred_region
      %44 = dma.done [#allocation5], 256
    $region21: #{tpu_custom_call.1} parent=1 // pred_fallthru
      _
    // Predicated region
    $region22: #{tpu_custom_call.1} parent=1 // pred_check
      _
    $region23: #{tpu_custom_call.1} parent=1 // pred_check_branch
      %46 = sbr.rel (0) target = $region25
    $region24: #{tpu_custom_call.1} parent=1 // pred_region
      %47 = dma.done [#allocation8], 256
    $region25: #{tpu_custom_call.1} parent=1 // pred_fallthru
      _
    %v48 = vld [vmem:[#allocation4] sm:$0xff]
    %v49 = vld [vmem:[#allocation4 + $0x8] sm:$0xff]
    %v50 = vld [vmem:[#allocation7] sm:$0xff]
    %v51 = vld [vmem:[#allocation7 + $0x8] sm:$0xff]
    %v52 = vadd.f32 %v48, %v50
    %v53 = vadd.f32 %v49, %v51
    %vm54 = vcmask 261120
    %v55 = vsel %vm54, %v52, 0.0
    %56 = vadd.xlane.f32.xlu0 %v55
    %v57 = vpop.xlane.xlu0 %56
    %v58 = vsel %vm54, %v53, 0.0
    %59 = vadd.xlane.f32.xlu0 %v58
    %v60 = vpop.xlane.xlu0 %59
    %v61 = vrcp.pop 32.0
    %v62 = vmul.f32 %v57, %v61
    %v63 = vmul.f32 %v60, %v61
    %v64 = vsub.f32 %v52, %v62
    %v65 = vsub.f32 %v53, %v63
    %v66 = vmul.f32 %v64, %v64
    %v67 = vmul.f32 %v65, %v65
    %v68 = vsel %vm54, %v66, 0.0
    %69 = vadd.xlane.f32.xlu0 %v68
    %v70 = vpop.xlane.xlu0 %69
    %v71 = vsel %vm54, %v67, 0.0
    %72 = vadd.xlane.f32.xlu0 %v71
    %v73 = vpop.xlane.xlu0 %72
    %v74 = vmul.f32 %v70, %v61
    %v75 = vmul.f32 %v73, %v61
    %v76 = vadd.f32 %v74, 1e-05
    %v77 = vadd.f32 %v75, 1e-05
    %v78 = vrsqrt.pop %v76
    %v79 = vrsqrt.pop %v77
    %v80 = vmul.f32 %v64, %v78
    %v81 = vmul.f32 %v65, %v79
    %v82 = vld [vmem:[%s3] sm:$0x1]
    %v84 = vlaneseq
    %v85 = vshrl.u32 %v84, 7
    %v86 = vsub.s32 0, %v85
    %v87 = vrot.slane %v82, %v86
    %v89 = vmul.f32 %v80, %v87
    %v90 = vmul.f32 %v81, %v87
    %v91 = vld [vmem:[%s4] sm:$0x1]
    %v93 = vlaneseq
    %v94 = vshrl.u32 %v93, 7
    %v95 = vsub.s32 0, %v94
    %v96 = vrot.slane %v91, %v95
    %v98 = vadd.f32 %v89, %v96
    %v99 = vadd.f32 %v90, %v96
    %100 = vst.msk [vmem:[#allocation9] sm:$0xff] %vm54, %v98
    %101 = vst.msk [vmem:[#allocation9 + $0x8] sm:$0xff] %vm54, %v99
    // Predicated region
    $region26: #{tpu_custom_call.1} parent=1 // pred_check
      _
    $region27: #{tpu_custom_call.1} parent=1 // pred_check_branch
      %103 = sbr.rel (0) target = $region29
    $region28: #{tpu_custom_call.1} parent=1 // pred_region
      %s105 = ssub.s32 256, 256
      %106 = vsyncadd [#allocation6], %s105
      %s107 = sshll.u32 [#allocation9], 4
      %s108 = int_to_ptr.vmem [resolvable:$true] %s107
      %113 = dma.vmem_to_hbm [thread:$0]  %s108, 256, %s5, [#allocation6], 128, 128, 8
    $region29: #{tpu_custom_call.1} parent=1 // pred_fallthru
      _
    // Predicated region
    $region30: #{tpu_custom_call.1} parent=1 // pred_check
      _
    $region31: #{tpu_custom_call.1} parent=1 // pred_check_branch
      %115 = sbr.rel (0) target = $region33
    $region32: #{tpu_custom_call.1} parent=1 // pred_region
      %116 = dma.done [#allocation6], 256
    $region33: #{tpu_custom_call.1} parent=1 // pred_fallthru
      _
    %117 = vsyncpa [#allocation5], 1
    %118 = vsyncpa [#allocation8], 1
    %119 = vsyncpa [#allocation6], 1

</llo_original>
